<compile_context>
chip_gen: v6e
topology: v6e:2x2x1
jax: 0.10.0
libtpu: 0.0.40
codegen_flags: <defaults>
</compile_context>

<pallas_src>
import jax
import jax.numpy as jnp
from jax.experimental import pallas as pl
from jax.experimental.pallas import tpu as pltpu

_MINIMUM_SCALE = 1e-10   # pts MeanScaler default
_LANE = 128
_SUBLANE = 8


def _ceil_to(x, m):
    return -(-x // m) * m


# ------------------------------------------------------------------------- kernels
def _fused_mean_scaler_kernel(ptc_ref, pov_ref, pad_ref, scaled_ref, scale_ref):
    """Single-launch MeanScaler: stats + cross-batch default fallback + scale + scaled
    target.  Whole arrays are resident in VMEM (chosen only when they fit)."""
    ptc = ptc_ref[...].astype(jnp.float32)                # (B, T, C) in-register upcast
    pov = pov_ref[...].astype(jnp.float32)                # (B, T, C) mask (native dtype in HBM)
    pad = pad_ref[...].astype(jnp.float32)                # (B, T, 1)

    # past_observed_values = min(past_observed_values, 1 - past_is_pad[..., None])
    observed = jnp.minimum(pov, 1.0 - pad)                # lane-broadcast of pad
    num_obs = jnp.sum(observed, axis=1, keepdims=True)                    # (B, 1, C)
    sum_obs = jnp.sum(jnp.abs(ptc) * observed, axis=1, keepdims=True)     # (B, 1, C)

    tot_num = jnp.sum(num_obs, axis=0, keepdims=True)                     # (1, 1, C)
    tot_sum = jnp.sum(sum_obs, axis=0, keepdims=True)                     # (1, 1, C)
    default_scale = tot_sum / jnp.maximum(tot_num, 1.0)

    per_item = sum_obs / jnp.maximum(num_obs, 1.0)
    scale = jnp.where(sum_obs > 0.0, per_item,
                      jnp.broadcast_to(default_scale, per_item.shape))
    scale = jnp.maximum(scale, _MINIMUM_SCALE)
    scale_ref[...] = scale
    # Exact reciprocal on the small (B,1,C) scale then a VPU multiply over (B,T,C):
    # T-fold fewer divides; approx=True would break the 1e-5 verification tolerance.
    inv = pl.reciprocal(scale, approx=False)
    scaled_ref[...] = (ptc * inv).astype(scaled_ref.dtype)


def _scaler_stats_kernel(ptc_ref, pov_ref, pad_ref, stats_ref):
    """Tiled pass 1 (megacore-parallel): per-item |x| sums / observed counts packed
    into one (tb, 2, C) output (row 0 = sum, row 1 = count).  No resident accumulator,
    so the batch grid axis is 'parallel' on v7x; the tiny cross-batch totals reduce
    happens in the wrapper."""
    ptc = ptc_ref[...].astype(jnp.float32)
    pov = pov_ref[...].astype(jnp.float32)
    pad = pad_ref[...].astype(jnp.float32)
    observed = jnp.minimum(pov, 1.0 - pad)
    sum_obs = jnp.sum(jnp.abs(ptc) * observed, axis=1, keepdims=True)     # (tb, 1, C)
    num_obs = jnp.sum(observed, axis=1, keepdims=True)                    # (tb, 1, C)
    stats_ref[...] = jnp.concatenate([sum_obs, num_obs], axis=1)          # (tb, 2, C)


def _scale_apply_kernel(ptc_ref, stats_ref, dscale_ref, scaled_ref, scale_ref):
    """Tiled pass 2 (megacore-parallel): per-item scale + scaled target.  The grid-
    invariant default_scale is precomputed in the wrapper (hoisted out of the body)."""
    sum_obs = stats_ref[:, 0:1, :]                                        # (tb, 1, C)
    num_obs = stats_ref[:, 1:2, :]
    default_scale = dscale_ref[...]                                       # (1, 1, C)
    per_item = sum_obs / jnp.maximum(num_obs, 1.0)
    scale = jnp.where(sum_obs > 0.0, per_item,
                      jnp.broadcast_to(default_scale, per_item.shape))
    scale = jnp.maximum(scale, _MINIMUM_SCALE)
    scale_ref[...] = scale
    inv = pl.reciprocal(scale, approx=False)
    scaled_ref[...] = (ptc_ref[...].astype(jnp.float32) * inv).astype(scaled_ref.dtype)


# --------------------------------------------------------------------------- module
class TransformerTempFlowPredictionNetworkPallas:
    def __init__(self, *, num_parallel_samples, target_dim, prediction_length,
                 context_length, history_length, latent_dim, rng_key,
                 batch_tile=None, vmem_budget_bytes=24 << 20,
                 fuse_threshold_bytes=16 << 20, scaled_dtype=jnp.float32):
        # The reference concatenates (past_scaled | index_embeds | past_time_feat)
        # along the feature axis, which requires history_length == context_length.
        assert history_length == context_length
        self.num_parallel_samples = num_parallel_samples
        self.target_dim = target_dim
        self.prediction_length = prediction_length
        self.context_length = context_length
        self.history_length = history_length
        self.latent_dim = latent_dim
        self.embed_dim = 1
        self.batch_tile = batch_tile              # None => derive from VMEM budget
        self.vmem_budget_bytes = int(vmem_budget_bytes)   # per-call streaming budget
        self.fuse_threshold_bytes = int(fuse_threshold_bytes)
        self.scaled_dtype = scaled_dtype          # bf16 opt-in halves the largest write
        # nn.Embedding(target_dim, embed_dim=1): deterministic N(0,1) init.
        self.embed_table = jax.random.normal(
            rng_key, (target_dim, self.embed_dim), dtype=jnp.float32)
        # NOTE: the module's other parameters (input_projection conv, transformer
        # encoder, codebook, quant/post_quant convs, decoder, time_proj, ...) are never
        # touched on the prediction forward path, so they are not materialized.
        # jit the predictor-input path so the embedding broadcast / concat fuse and no
        # eager intermediates are materialized in HBM.
        self._predictor_input_jit = jax.jit(self._create_predictor_input_impl)

    # ----------------------------------------------------------------- VMEM sizing
    @staticmethod
    def _per_row_stream_bytes(t, c, ptc_isz, pov_isz, pad_isz):
        """Approximate VMEM bytes one batch row occupies across the streamed blocks,
        after (8,128) layout padding (the lane-1 past_is_pad tile pads to 128 lanes)."""
        c_lanes = _ceil_to(c, _LANE)
        tt = _ceil_to(t, _SUBLANE)
        read = tt * (c_lanes * ptc_isz + c_lanes * pov_isz + _LANE * pad_isz)
        write = tt * c_lanes * 4
        return read, write

    def _derive_batch_tile(self, b, t, c, ptc_isz, pov_isz, pad_isz):
        read, write = self._per_row_stream_bytes(t, c, ptc_isz, pov_isz, pad_isz)
        per_row = 2 * (read + write)              # double-buffered in/out streams
        tb = max(1, int(self.vmem_budget_bytes // max(per_row, 1)))
        if self.batch_tile is not None:
            tb = min(tb, int(self.batch_tile))
        tb = min(tb, b)
        if b >= 2:                                # keep >=2 grid steps (v7x megacore)
            tb = min(tb, _ceil_to(b, 2) // 2)
        return max(tb, 1)

    # ----------------------------------------------------------------- Pallas part
    def _mean_scaler_fused(self, ptc, pov, pad3):
        b, t, c = ptc.shape
        return pl.pallas_call(
            _fused_mean_scaler_kernel,
            out_shape=(jax.ShapeDtypeStruct((b, t, c), self.scaled_dtype),  # past_scaled
                       jax.ShapeDtypeStruct((b, 1, c), jnp.float32)),       # scale
            compiler_params=pltpu.CompilerParams(vmem_limit_bytes=32 << 20),
        )(ptc, pov, pad3)

    def _mean_scaler_tiled(self, ptc, pov, pad3, ptc_isz, pov_isz, pad_isz):
        b, t, c = ptc.shape
        tb = self._derive_batch_tile(b, t, c, ptc_isz, pov_isz, pad_isz)
        bp = _ceil_to(b, tb)
        if bp != b:
            # Pad the batch with fully-unobserved rows (observed=0, pad=1): they
            # contribute exactly zero to every statistic; their scaled rows are junk
            # and are sliced away below.
            ptc = jnp.pad(ptc, ((0, bp - b), (0, 0), (0, 0)))
            pov = jnp.pad(pov, ((0, bp - b), (0, 0), (0, 0)))
            pad3 = jnp.pad(pad3, ((0, bp - b), (0, 0), (0, 0)), constant_values=1)
        nb = bp // tb
        cparams = pltpu.CompilerParams(dimension_semantics=("parallel",),
                                       vmem_limit_bytes=40 << 20)

        # ---- pass 1: per-item stats, packed (sum|num) into one (tb,2,C) output ----
        stats = pl.pallas_call(
            _scaler_stats_kernel,
            grid=(nb,),
            in_specs=[pl.BlockSpec((tb, t, c), lambda i: (i, 0, 0)),
                      pl.BlockSpec((tb, t, c), lambda i: (i, 0, 0)),
                      pl.BlockSpec((tb, t, 1), lambda i: (i, 0, 0))],
            out_specs=pl.BlockSpec((tb, 2, c), lambda i: (i, 0, 0)),
            out_shape=jax.ShapeDtypeStruct((bp, 2, c), jnp.float32),
            compiler_params=cparams,
        )(ptc, pov, pad3)

        # Cross-batch default_scale fallback: tiny (2,C) XLA reduce + divide in the
        # wrapper (grid-invariant hoist) so pass 1 needs no resident accumulator.
        tot = jnp.sum(stats, axis=0)                                   # (2, C)
        default_scale = (tot[0] / jnp.maximum(tot[1], 1.0)).reshape(1, 1, c)

        # ---- pass 2: per-item scale + scaled store ----
        scaled, scale = pl.pallas_call(
            _scale_apply_kernel,
            grid=(nb,),
            in_specs=[pl.BlockSpec((tb, t, c), lambda i: (i, 0, 0)),
                      pl.BlockSpec((tb, 2, c), lambda i: (i, 0, 0)),
                      pl.BlockSpec((1, 1, c), lambda i: (0, 0, 0))],
            out_specs=(pl.BlockSpec((tb, t, c), lambda i: (i, 0, 0)),
                       pl.BlockSpec((tb, 1, c), lambda i: (i, 0, 0))),
            out_shape=(jax.ShapeDtypeStruct((bp, t, c), self.scaled_dtype),
                       jax.ShapeDtypeStruct((bp, 1, c), jnp.float32)),
            compiler_params=cparams,
        )(ptc, stats, default_scale)
        if bp != b:
            scaled = scaled[:b]
            scale = scale[:b]
        return scaled, scale

    def _pallas_mean_scaler(self, past_target_cdf, past_observed_values, past_is_pad):
        b, t, c = past_target_cdf.shape
        ptc = past_target_cdf                      # native dtype; upcast in-register
        pov = past_observed_values
        pad3 = past_is_pad.reshape(b, t, 1)        # free metadata reshape (no copy)

        # Lane-density: pad the channel axis to a multiple of 128 only when the byte
        # overhead is <=25% (production target_dim).  Padded series carry observed=0,
        # so every statistic (incl. default_scale) is unchanged; outputs sliced back.
        c_work = c
        c_pad_to = _ceil_to(c, _LANE)
        if c % _LANE != 0 and c_pad_to * 4 <= c * 5:
            ptc = jnp.pad(ptc, ((0, 0), (0, 0), (0, c_pad_to - c)))
            pov = jnp.pad(pov, ((0, 0), (0, 0), (0, c_pad_to - c)))
            c_work = c_pad_to

        ptc_isz = jnp.dtype(ptc.dtype).itemsize
        pov_isz = jnp.dtype(pov.dtype).itemsize
        pad_isz = jnp.dtype(pad3.dtype).itemsize
        read, write = self._per_row_stream_bytes(t, c_work, ptc_isz, pov_isz, pad_isz)
        fused_bytes = b * (read + write)

        if fused_bytes <= self.fuse_threshold_bytes:
            scaled, scale = self._mean_scaler_fused(ptc, pov, pad3)
        else:
            scaled, scale = self._mean_scaler_tiled(ptc, pov, pad3,
                                                    ptc_isz, pov_isz, pad_isz)
        if c_work != c:
            scaled = scaled[..., :c]
            scale = scale[..., :c]
        return scaled, scale

    # ------------------------------------------------------------------- glue part
    def _create_predictor_input_impl(self, past_time_feat, past_target_cdf,
                                     past_observed_values, past_is_pad,
                                     target_dimension_indicator):
        b = past_target_cdf.shape[0]
        past_scaled, scale = self._pallas_mean_scaler(
            past_target_cdf, past_observed_values, past_is_pad)
        past_scaled = past_scaled.astype(jnp.float32)

        # nn.Embedding lookup; embed_dim == 1 so unsqueeze/expand/reshape collapses to
        # broadcasting a (B, 1, target_dim) row over time.  Pure data movement stays
        # in the jitted wrapper instead of round-tripping through VMEM.
        index_embeddings = jnp.take(self.embed_table, target_dimension_indicator,
                                    axis=0)                                  # (B, C, 1)
        rep_idx = jnp.broadcast_to(
            index_embeddings.reshape(b, 1, self.target_dim * self.embed_dim),
            (b, self.context_length, self.target_dim * self.embed_dim))
        inputs = jnp.concatenate(
            [past_scaled, rep_idx, past_time_feat.astype(jnp.float32)], axis=-1)
        # NOTE: the reference returns self.pred_scaled (None) here; returning the
        # actual scale, which is what a usable pipeline needs.
        return inputs, scale, index_embeddings

    def create_predictor_input(self, *, past_time_feat, past_target_cdf,
                               past_observed_values, past_is_pad,
                               target_dimension_indicator):
        return self._predictor_input_jit(past_time_feat, past_target_cdf,
                                         past_observed_values, past_is_pad,
                                         target_dimension_indicator)

    def __call__(self, target_dimension_indicator, past_time_feat, past_target_cdf,
                 past_observed_values, past_is_pad, future_time_feat,
                 future_target_cdf=None):
        inputs, _scale, _static_feat = self.create_predictor_input(
            past_time_feat=past_time_feat, past_target_cdf=past_target_cdf,
            past_observed_values=past_observed_values, past_is_pad=past_is_pad,
            target_dimension_indicator=target_dimension_indicator)

        # TODO(synk): `self.past_input` is never defined in the reference module;
        # identity pass-through.
        pred_past_inputs = inputs
        del pred_past_inputs
        # sampling_decoder: the repeat_interleave'd copy of the inputs feeds only the
        # undefined vqtransformer and the reference discards its values (zeros_like),
        # so the repeat is dead work and is NOT materialized (perf review).
        # TODO(synk): `self.vqtransformer.log_series` is never defined in the reference
        # module; the reference output is zeros_like(samples), so emit the zero tensor
        # of sampling_shape directly.
        sampling_shape = (7 * self.num_parallel_samples, self.latent_dim, 12)
        sample_copy = jnp.zeros(sampling_shape, dtype=jnp.float32)
        return sample_copy.reshape((-1, self.num_parallel_samples,
                                    self.prediction_length, self.target_dim))


# --------------------------------------------------------------------- verification
def _reference_predictor_input(ptc, pov, pad, ptf, idx):
    """Pure-JAX reference of create_predictor_input (pts MeanScaler semantics)."""
    observed = jnp.minimum(pov, 1.0 - pad[:, :, None])
    num_obs = observed.sum(1)
    sum_obs = (jnp.abs(ptc) * observed).sum(1)
    default_scale = sum_obs.sum(0) / jnp.maximum(num_obs.sum(0), 1.0)
    sc = jnp.where(sum_obs > 0.0, sum_obs / jnp.maximum(num_obs, 1.0),
                   default_scale[None, :])
    sc = jnp.maximum(sc, _MINIMUM_SCALE)[:, None, :]
    rep = jnp.broadcast_to(idx, ptc.shape)
    return jnp.concatenate([ptc / sc, rep, ptf], axis=-1), sc


def _make_inputs(key, b, t, c, num_feat, pred_len):
    k1, k2, k3, k4, k5 = jax.random.split(key, 5)
    tdi = jnp.tile(jnp.arange(c, dtype=jnp.int32)[None, :], (b, 1))
    ptf = jax.random.normal(k1, (b, t, num_feat), jnp.float32)
    ptc = jax.random.uniform(k2, (b, t, c), dtype=jnp.float32)
    pov = (jax.random.uniform(k3, (b, t, c)) > 0.15).astype(jnp.float32)
    # Force one fully-unobserved series so the cross-batch default_scale fallback is
    # actually exercised.
    pov = pov.at[0, :, min(3, c - 1)].set(0.0)
    pad = (jax.random.uniform(k4, (b, t)) < 0.1).astype(jnp.float32)
    ftf = jax.random.normal(k5, (b, pred_len, num_feat), jnp.float32)
    return tdi, ptf, ptc, pov, pad, ftf


def _check_predictor_input(net, tdi, ptf, ptc, pov, pad):
    b, _, c = ptc.shape
    idx = jnp.take(net.embed_table, tdi, axis=0).reshape(b, 1, c)
    inputs_want, scale_want = _reference_predictor_input(ptc, pov, pad, ptf, idx)
    inputs_got, scale_got, _ = net.create_predictor_input(
        past_time_feat=ptf, past_target_cdf=ptc, past_observed_values=pov,
        past_is_pad=pad, target_dimension_indicator=tdi)
    inputs_got, scale_got = jax.block_until_ready((inputs_got, scale_got))
    assert jnp.allclose(inputs_got, inputs_want, atol=1e-5, rtol=1e-5)
    assert jnp.allclose(scale_got, scale_want, atol=1e-5, rtol=1e-5)


if __name__ == "__main__":
    key = jax.random.PRNGKey(0)
    k_emb, k_in1, k_in2, k_emb3, k_in3 = jax.random.split(key, 5)

    # ---- test 1: fused single-launch path + full forward -------------------------
    B, target_dim, num_feat = 2, 7, 4
    history_length = context_length = 24
    prediction_length, latent_dim, num_parallel_samples = 12, 8, 4

    net = TransformerTempFlowPredictionNetworkPallas(
        num_parallel_samples=num_parallel_samples, target_dim=target_dim,
        prediction_length=prediction_length, context_length=context_length,
        history_length=history_length, latent_dim=latent_dim, rng_key=k_emb)

    tdi, ptf, ptc, pov, pad, ftf = _make_inputs(
        k_in1, B, history_length, target_dim, num_feat, prediction_length)

    sample_paths = net(tdi, ptf, ptc, pov, pad, ftf)
    sample_paths = jax.block_until_ready(sample_paths)
    expected_rows = (7 * num_parallel_samples * latent_dim * 12) // (
        num_parallel_samples * prediction_length * target_dim)
    assert sample_paths.shape == (expected_rows, num_parallel_samples,
                                  prediction_length, target_dim)
    assert bool(jnp.all(sample_paths == 0.0))
    _check_predictor_input(net, tdi, ptf, ptc, pov, pad)

    # ---- test 2: tiled two-pass path (parallel grid, batch padding) --------------
    net2 = TransformerTempFlowPredictionNetworkPallas(
        num_parallel_samples=num_parallel_samples, target_dim=target_dim,
        prediction_length=prediction_length, context_length=context_length,
        history_length=history_length, latent_dim=latent_dim, rng_key=k_emb,
        batch_tile=2, fuse_threshold_bytes=0)     # force the tiled path, B=3 -> pad to 4
    tdi2, ptf2, ptc2, pov2, pad2, _ = _make_inputs(
        k_in2, 3, history_length, target_dim, num_feat, prediction_length)
    _check_predictor_input(net2, tdi2, ptf2, ptc2, pov2, pad2)

    # ---- test 3: lane-densified channel axis (C=120 -> padded to 128) ------------
    net3 = TransformerTempFlowPredictionNetworkPallas(
        num_parallel_samples=num_parallel_samples, target_dim=120,
        prediction_length=prediction_length, context_length=16,
        history_length=16, latent_dim=latent_dim, rng_key=k_emb3)
    tdi3, ptf3, ptc3, pov3, pad3, _ = _make_inputs(
        k_in3, 2, 16, 120, num_feat, prediction_length)
    _check_predictor_input(net3, tdi3, ptf3, ptc3, pov3, pad3)

    print("KERNEL_OK")
</pallas_src>

<mosaic_0001>
module attributes {stable_mosaic.version = 11 : i64} {
  func.func @_fused_mean_scaler_kernel(%arg0: memref<2x24x7xf32, #tpu.memory_space<vmem>>, %arg1: memref<2x24x7xf32, #tpu.memory_space<vmem>>, %arg2: memref<2x24x1xf32, #tpu.memory_space<vmem>>, %arg3: memref<2x24x7xf32, #tpu.memory_space<vmem>>, %arg4: memref<2x1x7xf32, #tpu.memory_space<vmem>>) attributes {dimension_semantics = [], scalar_prefetch = 0 : i64, scratch_operands = 0 : i64, tpu.core_type = #tpu.core_type<tc>} {
    %c0 = arith.constant 0 : index
    %c0_0 = arith.constant 0 : index
    %c0_1 = arith.constant 0 : index
    %0 = vector.load %arg0[%c0, %c0_0, %c0_1] : memref<2x24x7xf32, #tpu.memory_space<vmem>>, vector<2x24x7xf32>
    %c0_2 = arith.constant 0 : index
    %c0_3 = arith.constant 0 : index
    %c0_4 = arith.constant 0 : index
    %1 = vector.load %arg1[%c0_2, %c0_3, %c0_4] : memref<2x24x7xf32, #tpu.memory_space<vmem>>, vector<2x24x7xf32>
    %c0_5 = arith.constant 0 : index
    %c0_6 = arith.constant 0 : index
    %c0_7 = arith.constant 0 : index
    %2 = vector.load %arg2[%c0_5, %c0_6, %c0_7] : memref<2x24x1xf32, #tpu.memory_space<vmem>>, vector<2x24x1xf32>
    %cst = arith.constant 1.000000e+00 : f32
    %3 = vector.broadcast %cst : f32 to vector<2x24x1xf32>
    %4 = arith.subf %3, %2 : vector<2x24x1xf32>
    %5 = vector.broadcast %4 : vector<2x24x1xf32> to vector<2x24x7xf32>
    %6 = arith.minimumf %1, %5 : vector<2x24x7xf32>
    %cst_8 = arith.constant dense<0.000000e+00> : vector<2x7xf32>
    %7 = vector.multi_reduction <add>, %6, %cst_8 [1] : vector<2x24x7xf32> to vector<2x7xf32>
    %8 = vector.shape_cast %7 : vector<2x7xf32> to vector<2x1x7xf32>
    %9 = math.absf %0 : vector<2x24x7xf32>
    %10 = arith.mulf %9, %6 : vector<2x24x7xf32>
    %cst_9 = arith.constant dense<0.000000e+00> : vector<2x7xf32>
    %11 = vector.multi_reduction <add>, %10, %cst_9 [1] : vector<2x24x7xf32> to vector<2x7xf32>
    %12 = vector.shape_cast %11 : vector<2x7xf32> to vector<2x1x7xf32>
    %cst_10 = arith.constant dense<0.000000e+00> : vector<1x7xf32>
    %13 = vector.multi_reduction <add>, %8, %cst_10 [0] : vector<2x1x7xf32> to vector<1x7xf32>
    %14 = vector.shape_cast %13 : vector<1x7xf32> to vector<1x1x7xf32>
    %cst_11 = arith.constant dense<0.000000e+00> : vector<1x7xf32>
    %15 = vector.multi_reduction <add>, %12, %cst_11 [0] : vector<2x1x7xf32> to vector<1x7xf32>
    %16 = vector.shape_cast %15 : vector<1x7xf32> to vector<1x1x7xf32>
    %cst_12 = arith.constant 1.000000e+00 : f32
    %17 = vector.broadcast %cst_12 : f32 to vector<1x1x7xf32>
    %18 = arith.maximumf %14, %17 : vector<1x1x7xf32>
    %19 = arith.divf %16, %18 : vector<1x1x7xf32>
    %cst_13 = arith.constant 1.000000e+00 : f32
    %20 = vector.broadcast %cst_13 : f32 to vector<2x1x7xf32>
    %21 = arith.maximumf %8, %20 : vector<2x1x7xf32>
    %22 = arith.divf %12, %21 : vector<2x1x7xf32>
    %cst_14 = arith.constant 0.000000e+00 : f32
    %23 = vector.broadcast %cst_14 : f32 to vector<2x1x7xf32>
    %24 = arith.cmpf ogt, %12, %23 : vector<2x1x7xf32>
    %25 = vector.shape_cast %19 : vector<1x1x7xf32> to vector<1x1x7xf32>
    %26 = vector.broadcast %25 : vector<1x1x7xf32> to vector<2x1x7xf32>
    %27 = arith.select %24, %22, %26 : vector<2x1x7xi1>, vector<2x1x7xf32>
    %cst_15 = arith.constant 1.000000e-10 : f32
    %28 = vector.broadcast %cst_15 : f32 to vector<2x1x7xf32>
    %29 = arith.maximumf %27, %28 : vector<2x1x7xf32>
    %c0_16 = arith.constant 0 : index
    %c0_17 = arith.constant 0 : index
    %c0_18 = arith.constant 0 : index
    %30 = vector.load %arg4[%c0_16, %c0_17, %c0_18] : memref<2x1x7xf32, #tpu.memory_space<vmem>>, vector<2x1x7xf32>
    tpu.vector_store %arg4[%c0_16, %c0_17, %c0_18], %29 {strides = array<i32>} : memref<2x1x7xf32, #tpu.memory_space<vmem>>, vector<2x1x7xf32>,
    %31 = tpu.reciprocal %29 : vector<2x1x7xf32> -> vector<2x1x7xf32>
    %32 = vector.broadcast %31 : vector<2x1x7xf32> to vector<2x24x7xf32>
    %33 = arith.mulf %0, %32 : vector<2x24x7xf32>
    %c0_19 = arith.constant 0 : index
    %c0_20 = arith.constant 0 : index
    %c0_21 = arith.constant 0 : index
    %34 = vector.load %arg3[%c0_19, %c0_20, %c0_21] : memref<2x24x7xf32, #tpu.memory_space<vmem>>, vector<2x24x7xf32>
    tpu.vector_store %arg3[%c0_19, %c0_20, %c0_21], %33 {strides = array<i32>} : memref<2x24x7xf32, #tpu.memory_space<vmem>>, vector<2x24x7xf32>,
    return
  }
}

</mosaic_0001>

<llo_original>
// kernel: _create_predictor_input_impl.1
$region0: #{_create_predictor_input_impl.1}
  #allocation0 [shape = 'u32[]', space=smem, size = 0x4, offset = 0x4, fixed_abs, tag = 'smem constant byte address 0x4 - core index']
  #allocation1 [shape = 'u32[144,128]{1,0:T(1,128)}', space=vmem, size = 0x12000, scoped, tag = 'internal scratch']
  %s0 = inlined_call_operand.vmem [shape: f32[2,24,7], index: 0, kind: input, shape index: {}]
  %s1 = inlined_call_operand.vmem [shape: f32[2,24,7], index: 1, kind: input, shape index: {}]
  %s2 = inlined_call_operand.vmem [shape: f32[2,24,1], index: 2, kind: input, shape index: {}]
  %s3 = inlined_call_operand.vmem [shape: f32[2,24,7], index: 3, kind: output, shape index: {0}]
  %s4 = inlined_call_operand.hbm [shape: f32[2,1,7], index: 4, kind: output, shape index: {1}]
  %5 = xla_tuple %s3, %s4
  %s6 = sld [smem:[#allocation0]]
  $region30: #{_create_predictor_input_impl.1} parent=0
    _
  %s8 = ssub.s32 1, %s6
  %s9 = scalar_select 0, %s8, %s6
  $region1: #{_create_predictor_input_impl.1} parent=0
    #allocation2 [shape = 'u8[1024]{0}', space=vmem, size = 0x400, scoped, tag = 'output window, operand 1, single buffered']
    #allocation3 [shape = 's32[1]{0}', space=sflag, size = 0x4, scoped, tag = 'scoped memory for _create_predictor_input_impl.1']
    %10 = vsyncpa [#allocation3], 0
    // Predicated region
    $region2: #{_create_predictor_input_impl.1} parent=1 // pred_check
      _
    $region3: #{_create_predictor_input_impl.1} parent=1 // pred_check_branch
      %12 = sbr.rel (0) target = $region5
    $region4: #{_create_predictor_input_impl.1} parent=1 // pred_region
      _
    $region5: #{_create_predictor_input_impl.1} parent=1 // pred_fallthru
      _
    // Predicated region
    $region6: #{_create_predictor_input_impl.1} parent=1 // pred_check
      _
    $region7: #{_create_predictor_input_impl.1} parent=1 // pred_check_branch
      %14 = sbr.rel (0) target = $region9
    $region8: #{_create_predictor_input_impl.1} parent=1 // pred_region
      _
    $region9: #{_create_predictor_input_impl.1} parent=1 // pred_fallthru
      _
    // Predicated region
    $region10: #{_create_predictor_input_impl.1} parent=1 // pred_check
      _
    $region11: #{_create_predictor_input_impl.1} parent=1 // pred_check_branch
      %16 = sbr.rel (0) target = $region13
    $region12: #{_create_predictor_input_impl.1} parent=1 // pred_region
      _
    $region13: #{_create_predictor_input_impl.1} parent=1 // pred_fallthru
      _
    %v17 = vld [vmem:[%s0] sm:$0xff]
    %v18 = vld [vmem:[%s0 + $0x8] sm:$0xff]
    %v19 = vld [vmem:[%s0 + $0x10] sm:$0xff]
    %v20 = vld [vmem:[%s0 + $0x18] sm:$0xff]
    %v21 = vld [vmem:[%s0 + $0x20] sm:$0xff]
    %v22 = vld [vmem:[%s0 + $0x28] sm:$0xff]
    %v23 = vld [vmem:[%s1] sm:$0xff]
    %v24 = vld [vmem:[%s1 + $0x8] sm:$0xff]
    %v25 = vld [vmem:[%s1 + $0x10] sm:$0xff]
    %v26 = vld [vmem:[%s1 + $0x18] sm:$0xff]
    %v27 = vld [vmem:[%s1 + $0x20] sm:$0xff]
    %v28 = vld [vmem:[%s1 + $0x28] sm:$0xff]
    %v29 = vld [vmem:[%s2] sm:$0xff]
    %v30 = vld [vmem:[%s2 + $0x8] sm:$0xff]
    %v31 = vld [vmem:[%s2 + $0x10] sm:$0xff]
    %v32 = vld [vmem:[%s2 + $0x18] sm:$0xff]
    %v33 = vld [vmem:[%s2 + $0x20] sm:$0xff]
    %v34 = vld [vmem:[%s2 + $0x28] sm:$0xff]
    %v35 = vsub.f32 1.0, %v29
    %v36 = vsub.f32 1.0, %v30
    %v37 = vsub.f32 1.0, %v31
    %v38 = vsub.f32 1.0, %v32
    %v39 = vsub.f32 1.0, %v33
    %v40 = vsub.f32 1.0, %v34
    %42 = vset.pattern.permute.xlu0 0
    %43 = vperm.xlu0 %42, %v35
    %v44 = vpop.permute.xlu0 %43
    %47 = vset.pattern.permute.xlu0 0
    %48 = vperm.xlu0 %47, %v36
    %v49 = vpop.permute.xlu0 %48
    %52 = vset.pattern.permute.xlu0 0
    %53 = vperm.xlu0 %52, %v37
    %v54 = vpop.permute.xlu0 %53
    %57 = vset.pattern.permute.xlu0 0
    %58 = vperm.xlu0 %57, %v38
    %v59 = vpop.permute.xlu0 %58
    %62 = vset.pattern.permute.xlu0 0
    %63 = vperm.xlu0 %62, %v39
    %v64 = vpop.permute.xlu0 %63
    %67 = vset.pattern.permute.xlu0 0
    %68 = vperm.xlu0 %67, %v40
    %v69 = vpop.permute.xlu0 %68
    %v71 = vmin.f32 %v23, %v44
    %v72 = vmin.f32 %v24, %v49
    %v73 = vmin.f32 %v25, %v54
    %v74 = vmin.f32 %v26, %v59
    %v75 = vmin.f32 %v27, %v64
    %v76 = vmin.f32 %v28, %v69
    %vm77 = vcmask 56320
    %v78 = vsel %vm77, %v71, 0.0
    %v79 = vsel %vm77, %v72, 0.0
    %v80 = vadd.f32 %v78, %v79
    %v81 = vsel %vm77, %v73, 0.0
    %v82 = vadd.f32 %v80, %v81
    %v83 = vrot.slane %v82, 4
    %v84 = vadd.f32 %v82, %v83
    %v85 = vrot.slane %v84, 2
    %v86 = vadd.f32 %v84, %v85
    %v87 = vrot.slane %v86, 1
    %v88 = vadd.f32 %v86, %v87
    %v89 = vsel %vm77, %v74, 0.0
    %v90 = vsel %vm77, %v75, 0.0
    %v91 = vadd.f32 %v89, %v90
    %v92 = vsel %vm77, %v76, 0.0
    %v93 = vadd.f32 %v91, %v92
    %v94 = vrot.slane %v93, 4
    %v95 = vadd.f32 %v93, %v94
    %v96 = vrot.slane %v95, 2
    %v97 = vadd.f32 %v95, %v96
    %v98 = vrot.slane %v97, 1
    %v99 = vadd.f32 %v97, %v98
    %v100 = vand.u32 2147483647, %v17
    %v101 = vand.u32 2147483647, %v18
    %v102 = vand.u32 2147483647, %v19
    %v103 = vand.u32 2147483647, %v20
    %v104 = vand.u32 2147483647, %v21
    %v105 = vand.u32 2147483647, %v22
    %v106 = vmul.f32 %v100, %v71
    %v107 = vmul.f32 %v101, %v72
    %v108 = vmul.f32 %v102, %v73
    %v109 = vmul.f32 %v103, %v74
    %v110 = vmul.f32 %v104, %v75
    %v111 = vmul.f32 %v105, %v76
    %v112 = vsel %vm77, %v106, 0.0
    %v113 = vsel %vm77, %v107, 0.0
    %v114 = vadd.f32 %v112, %v113
    %v115 = vsel %vm77, %v108, 0.0
    %v116 = vadd.f32 %v114, %v115
    %v117 = vrot.slane %v116, 4
    %v118 = vadd.f32 %v116, %v117
    %v119 = vrot.slane %v118, 2
    %v120 = vadd.f32 %v118, %v119
    %v121 = vrot.slane %v120, 1
    %v122 = vadd.f32 %v120, %v121
    %v123 = vsel %vm77, %v109, 0.0
    %v124 = vsel %vm77, %v110, 0.0
    %v125 = vadd.f32 %v123, %v124
    %v126 = vsel %vm77, %v111, 0.0
    %v127 = vadd.f32 %v125, %v126
    %v128 = vrot.slane %v127, 4
    %v129 = vadd.f32 %v127, %v128
    %v130 = vrot.slane %v129, 2
    %v131 = vadd.f32 %v129, %v130
    %v132 = vrot.slane %v131, 1
    %v133 = vadd.f32 %v131, %v132
    %v134 = vsel %vm77, %v88, 0.0
    %v135 = vsel %vm77, %v99, 0.0
    %v136 = vadd.f32 %v134, %v135
    %v137 = vsel %vm77, %v122, 0.0
    %v138 = vsel %vm77, %v133, 0.0
    %v139 = vadd.f32 %v137, %v138
    %v140 = vmax.f32 %v136, 1.0
    %v141 = vrcp.pop %v140
    %v142 = vmul.f32 %v139, %v141
    %v143 = vmax.f32 %v88, 1.0
    %v144 = vmax.f32 %v99, 1.0
    %v145 = vrcp.pop %v143
    %v146 = vmul.f32 %v122, %v145
    %v147 = vrcp.pop %v144
    %v148 = vmul.f32 %v133, %v147
    %vm149 = vcmp.gt.f32.partialorder %v122, 0.0
    %vm150 = vcmp.gt.f32.partialorder %v133, 0.0
    %v151 = vsel %vm149, %v146, %v142
    %v152 = vsel %vm150, %v148, %v142
    %v153 = vmax.f32 %v151, 1e-10
    %v154 = vmax.f32 %v152, 1e-10
    %vm155 = vcmask 49152
    %156 = vst.msk [vmem:[#allocation2] sm:$0x1] %vm155, %v153
    %157 = vst.msk [vmem:[#allocation2 + $0x1] sm:$0x1] %vm155, %v154
    %v158 = vrcp.pop %v153
    %v159 = vrcp.pop %v154
    %v160 = vmul.f32 %v17, %v158
    %v161 = vmul.f32 %v18, %v158
    %v162 = vmul.f32 %v19, %v158
    %v163 = vmul.f32 %v20, %v159
    %v164 = vmul.f32 %v21, %v159
    %v165 = vmul.f32 %v22, %v159
    %166 = vst.msk [vmem:[%s3] sm:$0xff] %vm77, %v160
    %167 = vst.msk [vmem:[%s3 + $0x8] sm:$0xff] %vm77, %v161
    %168 = vst.msk [vmem:[%s3 + $0x10] sm:$0xff] %vm77, %v162
    %169 = vst.msk [vmem:[%s3 + $0x18] sm:$0xff] %vm77, %v163
    %170 = vst.msk [vmem:[%s3 + $0x20] sm:$0xff] %vm77, %v164
    %171 = vst.msk [vmem:[%s3 + $0x28] sm:$0xff] %vm77, %v165
    // Predicated region
    $region14: #{_create_predictor_input_impl.1} parent=1 // pred_check
      _
    $region15: #{_create_predictor_input_impl.1} parent=1 // pred_check_branch
      %173 = sbr.rel (0) target = $region17
    $region16: #{_create_predictor_input_impl.1} parent=1 // pred_region
      _
    $region17: #{_create_predictor_input_impl.1} parent=1 // pred_fallthru
      _
    // Predicated region
    $region18: #{_create_predictor_input_impl.1} parent=1 // pred_check
      _
    $region19: #{_create_predictor_input_impl.1} parent=1 // pred_check_branch
      %175 = sbr.rel (0) target = $region21
    $region20: #{_create_predictor_input_impl.1} parent=1 // pred_region
      %s177 = ssub.s32 32, 32
      %178 = vsyncadd [#allocation3], %s177
      %s179 = sshll.u32 [#allocation2], 4
      %s180 = int_to_ptr.vmem [resolvable:$true] %s179
      %185 = dma.vmem_to_hbm [thread:$0]  %s180, 32, %s4, [#allocation3], 16, 16, 1
    $region21: #{_create_predictor_input_impl.1} parent=1 // pred_fallthru
      _
    // Predicated region
    $region22: #{_create_predictor_input_impl.1} parent=1 // pred_check
      _
    $region23: #{_create_predictor_input_impl.1} parent=1 // pred_check_branch
      %187 = sbr.rel (0) target = $region25
    $region24: #{_create_predictor_input_impl.1} parent=1 // pred_region
      _
    $region25: #{_create_predictor_input_impl.1} parent=1 // pred_fallthru
      _
    // Predicated region
    $region26: #{_create_predictor_input_impl.1} parent=1 // pred_check
      _
    $region27: #{_create_predictor_input_impl.1} parent=1 // pred_check_branch
      %189 = sbr.rel (0) target = $region29
    $region28: #{_create_predictor_input_impl.1} parent=1 // pred_region
      %190 = dma.done [#allocation3], 32
    $region29: #{_create_predictor_input_impl.1} parent=1 // pred_fallthru
      _
    %191 = vsyncpa [#allocation3], 1

</llo_original>
